<compile_context>
chip_gen: v5e
topology: v5e:2x2
jax: 0.10.0
libtpu: 0.0.40
codegen_flags: <defaults>
</compile_context>

<pallas_src>
import functools

import jax
import jax.numpy as jnp
from jax import lax
from jax.experimental import pallas as pl
from jax.experimental.pallas import tpu as pltpu

_LANE = 128
_SUBLANE = 8


def _round_up(n, m):
    return ((n + m - 1) // m) * m


def superposition_kernel(x_ref, tgt_ref, w_t_ref, w_ref, bi_ref,
                         logits_ref, hidden_ref, loss_ref,
                         *, true_b, tb, mask_rows):
    x = x_ref[...]                     # (TB, DP)   f32 or bf16
    w_t = w_t_ref[...]                 # (DP, HP)   encoder weight, pre-transposed
    w = w_ref[...]                     # (HP, DP)   encoder weight (tied decoder = its .T)
    bias = bi_ref[0:1, :]              # (1, DP)    decoder bias (f32)
    imp = bi_ref[1:2, :]               # (1, DP)    importance vector (f32)

    # encoder (no bias): hidden = x @ W_enc.T -> (TB, HP); f32 accumulation on the MXU.
    hidden = jnp.dot(x, w_t, preferred_element_type=jnp.float32)
    hidden_ref[...] = hidden.astype(hidden_ref.dtype)

    # decoder (tied weights): final = hidden @ W_dec.T + b = hidden @ W_enc + b -> (TB, DP)
    final = jnp.dot(hidden.astype(w.dtype), w, preferred_element_type=jnp.float32) + bias

    logits = jnp.maximum(final, 0.0)
    logits_ref[...] = logits.astype(logits_ref.dtype)

    # per-block partial loss: sum over this block's valid rows of imp * (targets - logits)^2.
    diff = tgt_ref[...].astype(jnp.float32) - logits
    sq = imp * diff * diff             # (TB, DP); padded lanes contribute 0 (imp zero-padded)
    if mask_rows:                      # rows past the true batch size contribute 0
        row = pl.program_id(0) * tb + lax.broadcasted_iota(jnp.int32, sq.shape, 0)
        sq = jnp.where(row < true_b, sq, 0.0)
    # fold sublane groups with plain VALU adds (no cross-lane XLU reduce in the kernel);
    # the wrapper finishes the reduction and the division by B*D.
    part = jnp.sum(sq.reshape(tb // _SUBLANE, _SUBLANE, sq.shape[-1]), axis=0)   # (8, DP)
    loss_ref[...] = part[None]         # (1, 8, DP)


def prepare_params(w_enc, b_dec, imp_vec, *, weight_dtype=jnp.float32):
    """Pack / pad the tiny parameters once, outside the per-call path.

    Feature dims are padded to the 128-lane width so all kernel loads/stores are
    lane-dense. Decoder weight is tied (= w_enc.T), so only w_enc is stored — in both
    orientations so neither matmul needs an in-kernel transpose.
    """
    H, D = w_enc.shape
    HP = _round_up(H, _LANE)
    DP = _round_up(D, _LANE)

    w = jnp.zeros((HP, DP), weight_dtype).at[:H, :D].set(w_enc.astype(weight_dtype))
    w_t = jnp.zeros((DP, HP), weight_dtype).at[:D, :H].set(w_enc.T.astype(weight_dtype))

    bias_imp = jnp.zeros((_SUBLANE, DP), jnp.float32)
    bias_imp = bias_imp.at[0, :D].set(b_dec.astype(jnp.float32))
    bias_imp = bias_imp.at[1, :D].set(imp_vec.astype(jnp.float32))

    return {"w": w, "w_t": w_t, "bias_imp": bias_imp, "D": D, "H": H, "DP": DP, "HP": HP}


def superposition_forward(x, targets, params, *, tb=512):
    """x, targets: (B, D) float. params: output of prepare_params().

    tb: batch tile (multiple of 8). ~512 is safe on every chip; v5e/v6e (128 MiB VMEM)
    can go to 1024, keep <=512 on v7x (64 MiB VMEM).
    """
    B, D = x.shape
    H, DP, HP = params["H"], params["DP"], params["HP"]
    w, w_t, bias_imp = params["w"], params["w_t"], params["bias_imp"]
    in_dtype = w.dtype                 # bulk tensors travel in the weight dtype (f32 / bf16)

    tb = max(_SUBLANE, min(int(tb), _round_up(B, _SUBLANE)))
    tb = _round_up(tb, _SUBLANE)
    b_pad = _round_up(B, tb)
    grid = (b_pad // tb,)

    # Lane-pad the bulk tensors.
    # TODO(synk): at scale, have the data pipeline emit x/targets already lane-padded;
    # this per-call pad is an extra XLA op + HBM round trip.
    x_p = jnp.zeros((b_pad, DP), in_dtype).at[:B, :D].set(x.astype(in_dtype))
    t_p = jnp.zeros((b_pad, DP), in_dtype).at[:B, :D].set(targets.astype(in_dtype))

    kernel = functools.partial(superposition_kernel, true_b=B, tb=tb,
                               mask_rows=(b_pad != B))

    in_itemsize = jnp.dtype(in_dtype).itemsize
    # double-buffered per-step blocks + resident params, plus headroom for compiler temps.
    vmem_bytes = 2 * (2 * tb * DP * in_itemsize          # x, targets tiles
                      + tb * DP * 4 + tb * HP * 4        # logits, hidden tiles
                      + _SUBLANE * DP * 4)               # loss-partial tile
    vmem_bytes += 2 * HP * DP * in_itemsize + _SUBLANE * DP * 4   # resident w, w_t, bias/imp
    vmem_limit = int(min(max(2 * vmem_bytes, 8 << 20), 48 << 20))

    cost = pl.CostEstimate(
        flops=4 * b_pad * DP * HP,                        # two matmuls, padded shapes
        transcendentals=0,
        bytes_accessed=(2 * b_pad * DP * in_itemsize      # x, targets in
                        + b_pad * DP * 4 + b_pad * HP * 4 # logits, hidden out
                        + 2 * HP * DP * in_itemsize       # weights
                        + _SUBLANE * DP * 4               # bias + importance
                        + grid[0] * _SUBLANE * DP * 4))   # loss partials

    logits_p, hidden_p, loss_parts = pl.pallas_call(
        kernel,
        out_shape=(
            jax.ShapeDtypeStruct((b_pad, DP), jnp.float32),              # logits (lane-padded)
            jax.ShapeDtypeStruct((b_pad, HP), jnp.float32),              # hidden (lane-padded)
            jax.ShapeDtypeStruct((grid[0], _SUBLANE, DP), jnp.float32),  # per-block loss sums
        ),
        grid_spec=pltpu.PrefetchScalarGridSpec(
            num_scalar_prefetch=0,
            grid=grid,
            in_specs=[
                pl.BlockSpec((tb, DP), lambda i: (i, 0)),            # x tile
                pl.BlockSpec((tb, DP), lambda i: (i, 0)),            # targets tile
                pl.BlockSpec((DP, HP), lambda i: (0, 0)),            # w_t   (resident)
                pl.BlockSpec((HP, DP), lambda i: (0, 0)),            # w     (resident)
                pl.BlockSpec((_SUBLANE, DP), lambda i: (0, 0)),      # bias + imp (resident)
            ],
            out_specs=(
                pl.BlockSpec((tb, DP), lambda i: (i, 0)),
                pl.BlockSpec((tb, HP), lambda i: (i, 0)),
                pl.BlockSpec((1, _SUBLANE, DP), lambda i: (i, 0, 0)),
            ),
        ),
        compiler_params=pltpu.CompilerParams(
            dimension_semantics=("parallel",),            # v7x: both TensorCores split the batch
            vmem_limit_bytes=vmem_limit,
        ),
        cost_estimate=cost,
    )(x_p, t_p, w_t, w, bias_imp)

    logits = logits_p[:B, :D]
    hidden = hidden_p[:B, :H]
    loss = loss_parts.sum() / (B * D)   # mean over all B*D elements (matches torch .mean())
    return logits, loss, hidden


if __name__ == "__main__":
    # SuperPositionConfig: input_size=20, hidden_layer_size=5
    D, H = 20, 5
    B = 60          # not a multiple of the tile -> also exercises the row-masking path

    key = jax.random.PRNGKey(0)
    k_x, k_we, k_bd = jax.random.split(key, 3)

    w_enc = jax.random.uniform(k_we, (H, D), jnp.float32, -0.2, 0.2)   # encoder.weight
    w_dec = w_enc.T                                                     # tied decoder.weight
    b_dec = jax.random.uniform(k_bd, (D,), jnp.float32, -0.2, 0.2)      # decoder.bias
    imp_vec = jnp.power(0.7, jnp.arange(D, dtype=jnp.float32))          # importance vector

    x = jax.random.uniform(k_x, (B, D), jnp.float32)
    targets = x                                                         # autoencoder-style target

    # Pure-JAX reference (explicit tied decoder weight).
    hidden_ref = x @ w_enc.T
    logits_ref = jnp.maximum(hidden_ref @ w_dec.T + b_dec, 0.0)
    loss_ref = jnp.mean(imp_vec * (targets - logits_ref) ** 2)

    # f32 path: exact module semantics. tb=16 -> grid of 4 steps exercises the pipeline.
    params = prepare_params(w_enc, b_dec, imp_vec)
    logits, loss, hidden = superposition_forward(x, targets, params, tb=16)
    jax.block_until_ready((logits, loss, hidden))
    assert jnp.allclose(logits, logits_ref, atol=1e-5), "logits mismatch (f32)"
    assert jnp.allclose(hidden, hidden_ref, atol=1e-5), "hidden mismatch (f32)"
    assert jnp.allclose(loss, loss_ref, atol=1e-5), "loss mismatch (f32)"

    # bf16 bulk-tensor path (memory-bound regime); f32 accumulate inside -> looser tolerance.
    params_bf16 = prepare_params(w_enc, b_dec, imp_vec, weight_dtype=jnp.bfloat16)
    logits_b, loss_b, hidden_b = superposition_forward(x, targets, params_bf16, tb=16)
    jax.block_until_ready((logits_b, loss_b, hidden_b))
    assert jnp.allclose(logits_b, logits_ref, atol=5e-2), "logits mismatch (bf16)"
    assert jnp.allclose(hidden_b, hidden_ref, atol=5e-2), "hidden mismatch (bf16)"
    assert abs(float(loss_b) - float(loss_ref)) <= 0.1 * float(loss_ref) + 1e-3, "loss mismatch (bf16)"

    print("KERNEL_OK")
</pallas_src>

<mosaic_0001>
module attributes {stable_mosaic.version = 11 : i64} {
  func.func @superposition_kernel(%arg0: i32, %arg1: memref<16x128xf32, #tpu.memory_space<vmem>>, %arg2: memref<16x128xf32, #tpu.memory_space<vmem>>, %arg3: memref<128x128xf32, #tpu.memory_space<vmem>>, %arg4: memref<128x128xf32, #tpu.memory_space<vmem>>, %arg5: memref<8x128xf32, #tpu.memory_space<vmem>>, %arg6: memref<16x128xf32, #tpu.memory_space<vmem>>, %arg7: memref<16x128xf32, #tpu.memory_space<vmem>>, %arg8: memref<1x8x128xf32, #tpu.memory_space<vmem>>) attributes {dimension_semantics = [#tpu.dimension_semantics<parallel>], iteration_bounds = array<i64: 4>, scalar_prefetch = 0 : i64, scratch_operands = 0 : i64, tpu.core_type = #tpu.core_type<tc>, window_params = [{transform_indices = @transform_0, window_bounds = array<i64: 16, 128>}, {transform_indices = @transform_1, window_bounds = array<i64: 16, 128>}, {pipeline_mode = #tpu.pipeline_mode<synchronous>, transform_indices = @transform_2, window_bounds = array<i64: 128, 128>}, {pipeline_mode = #tpu.pipeline_mode<synchronous>, transform_indices = @transform_3, window_bounds = array<i64: 128, 128>}, {pipeline_mode = #tpu.pipeline_mode<synchronous>, transform_indices = @transform_4, window_bounds = array<i64: 8, 128>}, {transform_indices = @transform_5, window_bounds = array<i64: 16, 128>}, {transform_indices = @transform_6, window_bounds = array<i64: 16, 128>}, {transform_indices = @transform_7, window_bounds = array<i64: 1, 8, 128>}]} {
    %c0 = arith.constant 0 : index
    %c0_0 = arith.constant 0 : index
    %0 = vector.load %arg1[%c0, %c0_0] : memref<16x128xf32, #tpu.memory_space<vmem>>, vector<16x128xf32>
    %c0_1 = arith.constant 0 : index
    %c0_2 = arith.constant 0 : index
    %1 = vector.load %arg3[%c0_1, %c0_2] : memref<128x128xf32, #tpu.memory_space<vmem>>, vector<128x128xf32>
    %c0_3 = arith.constant 0 : index
    %c0_4 = arith.constant 0 : index
    %2 = vector.load %arg4[%c0_3, %c0_4] : memref<128x128xf32, #tpu.memory_space<vmem>>, vector<128x128xf32>
    %c0_5 = arith.constant 0 : index
    %c0_6 = arith.constant 0 : index
    %3 = vector.load %arg5[%c0_5, %c0_6] : memref<8x128xf32, #tpu.memory_space<vmem>>, vector<1x128xf32>
    %c1 = arith.constant 1 : index
    %c0_7 = arith.constant 0 : index
    %4 = vector.load %arg5[%c1, %c0_7] : memref<8x128xf32, #tpu.memory_space<vmem>>, vector<1x128xf32>
    %cst = arith.constant dense<0.000000e+00> : vector<16x128xf32>
    %5 = tpu.matmul %0, %1, %cst {dimension_numbers = #tpu.dot_dimension_numbers<[1], [0], [0], [1], [0, 0, 1, 1], [], []>} : vector<16x128xf32>, vector<128x128xf32>, vector<16x128xf32> -> vector<16x128xf32>
    %c0_8 = arith.constant 0 : index
    %c0_9 = arith.constant 0 : index
    %6 = vector.load %arg7[%c0_8, %c0_9] : memref<16x128xf32, #tpu.memory_space<vmem>>, vector<16x128xf32>
    tpu.vector_store %arg7[%c0_8, %c0_9], %5 {strides = array<i32>} : memref<16x128xf32, #tpu.memory_space<vmem>>, vector<16x128xf32>,
    %cst_10 = arith.constant dense<0.000000e+00> : vector<16x128xf32>
    %7 = tpu.matmul %5, %2, %cst_10 {dimension_numbers = #tpu.dot_dimension_numbers<[1], [0], [0], [1], [0, 0, 1, 1], [], []>} : vector<16x128xf32>, vector<128x128xf32>, vector<16x128xf32> -> vector<16x128xf32>
    %8 = vector.broadcast %3 : vector<1x128xf32> to vector<16x128xf32>
    %9 = arith.addf %7, %8 : vector<16x128xf32>
    %cst_11 = arith.constant 0.000000e+00 : f32
    %10 = vector.broadcast %cst_11 : f32 to vector<16x128xf32>
    %11 = arith.maximumf %9, %10 : vector<16x128xf32>
    %c0_12 = arith.constant 0 : index
    %c0_13 = arith.constant 0 : index
    %12 = vector.load %arg6[%c0_12, %c0_13] : memref<16x128xf32, #tpu.memory_space<vmem>>, vector<16x128xf32>
    tpu.vector_store %arg6[%c0_12, %c0_13], %11 {strides = array<i32>} : memref<16x128xf32, #tpu.memory_space<vmem>>, vector<16x128xf32>,
    %c0_14 = arith.constant 0 : index
    %c0_15 = arith.constant 0 : index
    %13 = vector.load %arg2[%c0_14, %c0_15] : memref<16x128xf32, #tpu.memory_space<vmem>>, vector<16x128xf32>
    %14 = arith.subf %13, %11 : vector<16x128xf32>
    %15 = vector.broadcast %4 : vector<1x128xf32> to vector<16x128xf32>
    %16 = arith.mulf %15, %14 : vector<16x128xf32>
    %17 = arith.mulf %16, %14 : vector<16x128xf32>
    %c16_i32 = arith.constant 16 : i32
    %18 = arith.muli %arg0, %c16_i32 : i32
    %19 = tpu.iota {dimensions = array<i32: 0>} : vector<16x128xi32>
    %20 = vector.broadcast %18 : i32 to vector<16x128xi32>
    %21 = arith.addi %20, %19 : vector<16x128xi32>
    %c60_i32 = arith.constant 60 : i32
    %22 = vector.broadcast %c60_i32 : i32 to vector<16x128xi32>
    %23 = arith.cmpi slt, %21, %22 : vector<16x128xi32>
    %cst_16 = arith.constant 0.000000e+00 : f32
    %24 = vector.broadcast %cst_16 : f32 to vector<16x128xf32>
    %25 = arith.select %23, %17, %24 : vector<16x128xi1>, vector<16x128xf32>
    %26 = vector.shape_cast %25 : vector<16x128xf32> to vector<2x8x128xf32>
    %cst_17 = arith.constant dense<0.000000e+00> : vector<8x128xf32>
    %27 = vector.multi_reduction <add>, %26, %cst_17 [0] : vector<2x8x128xf32> to vector<8x128xf32>
    %28 = vector.shape_cast %27 : vector<8x128xf32> to vector<1x8x128xf32>
    %c0_18 = arith.constant 0 : index
    %c0_19 = arith.constant 0 : index
    %c0_20 = arith.constant 0 : index
    %29 = vector.load %arg8[%c0_18, %c0_19, %c0_20] : memref<1x8x128xf32, #tpu.memory_space<vmem>>, vector<1x8x128xf32>
    tpu.vector_store %arg8[%c0_18, %c0_19, %c0_20], %28 {strides = array<i32>} : memref<1x8x128xf32, #tpu.memory_space<vmem>>, vector<1x8x128xf32>,
    return
  }
  func.func @transform_0(%arg0: i32) -> (i32, i32) {
    %c0_i32 = arith.constant 0 : i32
    %c0_i32_0 = arith.constant 0 : i32
    return %arg0, %c0_i32 : i32, i32
  }
  func.func @transform_1(%arg0: i32) -> (i32, i32) {
    %c0_i32 = arith.constant 0 : i32
    %c0_i32_0 = arith.constant 0 : i32
    return %arg0, %c0_i32 : i32, i32
  }
  func.func @transform_2(%arg0: i32) -> (i32, i32) {
    %c0_i32 = arith.constant 0 : i32
    %c0_i32_0 = arith.constant 0 : i32
    %c0_i32_1 = arith.constant 0 : i32
    return %c0_i32, %c0_i32_0 : i32, i32
  }
  func.func @transform_3(%arg0: i32) -> (i32, i32) {
    %c0_i32 = arith.constant 0 : i32
    %c0_i32_0 = arith.constant 0 : i32
    %c0_i32_1 = arith.constant 0 : i32
    return %c0_i32, %c0_i32_0 : i32, i32
  }
  func.func @transform_4(%arg0: i32) -> (i32, i32) {
    %c0_i32 = arith.constant 0 : i32
    %c0_i32_0 = arith.constant 0 : i32
    %c0_i32_1 = arith.constant 0 : i32
    return %c0_i32, %c0_i32_0 : i32, i32
  }
  func.func @transform_5(%arg0: i32) -> (i32, i32) {
    %c0_i32 = arith.constant 0 : i32
    %c0_i32_0 = arith.constant 0 : i32
    return %arg0, %c0_i32 : i32, i32
  }
  func.func @transform_6(%arg0: i32) -> (i32, i32) {
    %c0_i32 = arith.constant 0 : i32
    %c0_i32_0 = arith.constant 0 : i32
    return %arg0, %c0_i32 : i32, i32
  }
  func.func @transform_7(%arg0: i32) -> (i32, i32, i32) {
    %c0_i32 = arith.constant 0 : i32
    %c0_i32_0 = arith.constant 0 : i32
    %c0_i32_1 = arith.constant 0 : i32
    return %arg0, %c0_i32, %c0_i32_0 : i32, i32, i32
  }
}

</mosaic_0001>

<llo_original>
// kernel: tpu_custom_call.1
$region0: #{tpu_custom_call.1}
  #allocation0 [shape = 'u32[]', space=smem, size = 0x4, offset = 0x4, fixed_abs, tag = 'smem constant byte address 0x4 - core index']
  #allocation1 [shape = 'u32[72,128]{1,0:T(1,128)}', space=vmem, size = 0x9000, scoped, tag = 'internal scratch']
  %s0 = inlined_call_operand.hbm [shape: f32[64,128], index: 0, kind: input, shape index: {}]
  %s1 = inlined_call_operand.hbm [shape: f32[64,128], index: 1, kind: input, shape index: {}]
  %s2 = inlined_call_operand.hbm [shape: f32[128,128], index: 2, kind: input, shape index: {}]
  %s3 = inlined_call_operand.hbm [shape: f32[128,128], index: 3, kind: input, shape index: {}]
  %s4 = inlined_call_operand.hbm [shape: f32[8,128], index: 4, kind: input, shape index: {}]
  %s5 = inlined_call_operand.hbm [shape: f32[64,128], index: 5, kind: output, shape index: {0}]
  %s6 = inlined_call_operand.hbm [shape: f32[64,128], index: 6, kind: output, shape index: {1}]
  %s7 = inlined_call_operand.hbm [shape: f32[4,8,128], index: 7, kind: output, shape index: {2}]
  %8 = xla_tuple %s5, %s6, %s7
  %s9 = sld [smem:[#allocation0]]
  $region89: #{tpu_custom_call.1} parent=0
    _
  %s11 = ssub.s32 1, %s9
  %s12 = scalar_select 0, %s11, %s9
  $region1: #{tpu_custom_call.1} parent=0
    #allocation2 [shape = 'u8[16384]{0}', space=vmem, size = 0x4000, scoped, tag = 'input window, operand 0']
    #allocation3 [shape = 's32[2]{0}', space=sflag, size = 0x8, scoped, tag = 'scoped memory for tpu_custom_call.1']
    #allocation4 [shape = 's32[2]{0}', space=sflag, size = 0x8, scoped, tag = 'scoped memory for tpu_custom_call.1']
    #allocation5 [shape = 'u8[16384]{0}', space=vmem, size = 0x4000, scoped, tag = 'input window, operand 1']
    #allocation6 [shape = 's32[2]{0}', space=sflag, size = 0x8, scoped, tag = 'scoped memory for tpu_custom_call.1']
    #allocation7 [shape = 'u8[65536]{0}', space=vmem, size = 0x10000, scoped, tag = 'input window, operand 2, single buffered']
    #allocation8 [shape = 'u8[65536]{0}', space=vmem, size = 0x10000, scoped, tag = 'input window, operand 3, single buffered']
    #allocation9 [shape = 's32[1]{0}', space=sflag, size = 0x4, scoped, tag = 'scoped memory for tpu_custom_call.1']
    #allocation10 [shape = 'u8[4096]{0}', space=vmem, size = 0x1000, scoped, tag = 'input window, operand 4, single buffered']
    #allocation11 [shape = 'u8[16384]{0}', space=vmem, size = 0x4000, scoped, tag = 'output window, operand 0']
    #allocation12 [shape = 'u8[16384]{0}', space=vmem, size = 0x4000, scoped, tag = 'output window, operand 1']
    #allocation13 [shape = 's32[2]{0}', space=sflag, size = 0x8, scoped, tag = 'scoped memory for tpu_custom_call.1']
    #allocation14 [shape = 'u8[8192]{0}', space=vmem, size = 0x2000, scoped, tag = 'output window, operand 2']
    %13 = vsyncpa [#allocation3], 0
    %s14 = scalar_lea.sflag [#allocation3], 1
    %15 = vsyncpa %s14, 0
    %16 = vsyncpa [#allocation6], 0
    %s17 = scalar_lea.sflag [#allocation6], 1
    %18 = vsyncpa %s17, 0
    %19 = vsyncpa [#allocation9], 0
    %20 = vsyncpa [#allocation4], 0
    %s21 = scalar_lea.sflag [#allocation4], 1
    %22 = vsyncpa %s21, 0
    %23 = vsyncpa [#allocation13], 0
    %s24 = scalar_lea.sflag [#allocation13], 1
    %25 = vsyncpa %s24, 0
    loop: start=0, step=1, limit=6
    $region2: #{tpu_custom_call.1} parent=1 // loop_pre_header
      _
    $region3: #{tpu_custom_call.1} parent=1 // loop_header
      %s27 = sphi 0, %s31
      %p28 = scmp.ge.s32.totalorder %s27, 6
      %s37 = sphi 0, %s39
      %s40 = sphi 0, %s37
      %s41 = sphi 0, %s40
      %s57 = sphi 0, %s41
      %s63 = sphi 0, %s65
      %s66 = sphi 0, %s63
      %s67 = sphi 0, %s66
      %s83 = sphi 0, %s67
      %s87 = sphi 0, %s87
      %s89 = sphi 0, %s87
      %s90 = sphi 0, %s89
      %s104 = sphi 0, %s90
      %s108 = sphi 0, %s108
      %s110 = sphi 0, %s108
      %s111 = sphi 0, %s110
      %s125 = sphi 0, %s111
      %s129 = sphi 0, %s129
      %s131 = sphi 0, %s129
      %s132 = sphi 0, %s131
      %s146 = sphi 0, %s132
      %s152 = sphi 0, %s154
      %s155 = sphi 0, %s152
      %s156 = sphi 0, %s155
      %s172 = sphi 0, %s156
      %s178 = sphi 0, %s180
      %s181 = sphi 0, %s178
      %s182 = sphi 0, %s181
      %s198 = sphi 0, %s182
      %s204 = sphi 0, %s206
      %s207 = sphi 0, %s204
      %s208 = sphi 0, %s207
      %s224 = sphi 0, %s208
    $region4: #{tpu_custom_call.1} parent=1 // loop_header_branch
      %30 = sbr.rel (%p28) target = $region8
    $region5: #{tpu_custom_call.1} parent=1 // loop_body
      %s32 = ssub.s32 %s27, 1
      %s33 = ssub.s32 %s27, 2
      %s34 = sadd.s32 %s27, 1
      %s35 = ssub.s32 %s27, %s34
      %p36 = scmp.eq.s32.totalorder %s35, 0
      %s38 = sadd.s32 %s37, 1
      %s39 = scalar_select %p36, %s37, %s38
      %p42 = pneg %p36
      %p43 = scmp.eq.s32.totalorder %s27, 3
      %p44 = por %p42, %p43
      %p45 = scmp.ne.s32.totalorder %s37, %s40
      %p46 = scmp.eq.s32.totalorder %s27, 0
      %p47 = por %p45, %p46
      %p48 = scmp.ne.s32.totalorder %s37, %s40
      %p49 = scmp.eq.s32.totalorder %s32, 3
      %p50 = por %p48, %p49
      %p51 = scmp.ne.s32.totalorder %s40, %s41
      %p52 = scmp.eq.s32.totalorder %s32, 0
      %p53 = por %p51, %p52
      %p54 = scmp.ne.s32.totalorder %s40, %s41
      %p55 = scmp.eq.s32.totalorder %s33, 3
      %p56 = por %p54, %p55
      %p58 = scmp.ne.s32.totalorder %s41, %s57
      %p59 = scmp.eq.s32.totalorder %s33, 0
      %p60 = por %p58, %p59
      %s61 = ssub.s32 %s27, %s34
      %p62 = scmp.eq.s32.totalorder %s61, 0
      %s64 = sadd.s32 %s63, 1
      %s65 = scalar_select %p62, %s63, %s64
      %p68 = pneg %p62
      %p69 = scmp.eq.s32.totalorder %s27, 3
      %p70 = por %p68, %p69
      %p71 = scmp.ne.s32.totalorder %s63, %s66
      %p72 = scmp.eq.s32.totalorder %s27, 0
      %p73 = por %p71, %p72
      %p74 = scmp.ne.s32.totalorder %s63, %s66
      %p75 = scmp.eq.s32.totalorder %s32, 3
      %p76 = por %p74, %p75
      %p77 = scmp.ne.s32.totalorder %s66, %s67
      %p78 = scmp.eq.s32.totalorder %s32, 0
      %p79 = por %p77, %p78
      %p80 = scmp.ne.s32.totalorder %s66, %s67
      %p81 = scmp.eq.s32.totalorder %s33, 3
      %p82 = por %p80, %p81
      %p84 = scmp.ne.s32.totalorder %s67, %s83
      %p85 = scmp.eq.s32.totalorder %s33, 0
      %p86 = por %p84, %p85
      %s88 = sadd.s32 %s87, 1
      %p91 = scmp.eq.s32.totalorder %s27, 3
      %p92 = scmp.ne.s32.totalorder %s87, %s89
      %p93 = scmp.eq.s32.totalorder %s27, 0
      %p94 = por %p92, %p93
      %p95 = scmp.ne.s32.totalorder %s87, %s89
      %p96 = scmp.eq.s32.totalorder %s32, 3
      %p97 = por %p95, %p96
      %p98 = scmp.ne.s32.totalorder %s89, %s90
      %p99 = scmp.eq.s32.totalorder %s32, 0
      %p100 = por %p98, %p99
      %p101 = scmp.ne.s32.totalorder %s89, %s90
      %p102 = scmp.eq.s32.totalorder %s33, 3
      %p103 = por %p101, %p102
      %p105 = scmp.ne.s32.totalorder %s90, %s104
      %p106 = scmp.eq.s32.totalorder %s33, 0
      %p107 = por %p105, %p106
      %s109 = sadd.s32 %s108, 1
      %p112 = scmp.eq.s32.totalorder %s27, 3
      %p113 = scmp.ne.s32.totalorder %s108, %s110
      %p114 = scmp.eq.s32.totalorder %s27, 0
      %p115 = por %p113, %p114
      %p116 = scmp.ne.s32.totalorder %s108, %s110
      %p117 = scmp.eq.s32.totalorder %s32, 3
      %p118 = por %p116, %p117
      %p119 = scmp.ne.s32.totalorder %s110, %s111
      %p120 = scmp.eq.s32.totalorder %s32, 0
      %p121 = por %p119, %p120
      %p122 = scmp.ne.s32.totalorder %s110, %s111
      %p123 = scmp.eq.s32.totalorder %s33, 3
      %p124 = por %p122, %p123
      %p126 = scmp.ne.s32.totalorder %s111, %s125
      %p127 = scmp.eq.s32.totalorder %s33, 0
      %p128 = por %p126, %p127
      %s130 = sadd.s32 %s129, 1
      %p133 = scmp.eq.s32.totalorder %s27, 3
      %p134 = scmp.ne.s32.totalorder %s129, %s131
      %p135 = scmp.eq.s32.totalorder %s27, 0
      %p136 = por %p134, %p135
      %p137 = scmp.ne.s32.totalorder %s129, %s131
      %p138 = scmp.eq.s32.totalorder %s32, 3
      %p139 = por %p137, %p138
      %p140 = scmp.ne.s32.totalorder %s131, %s132
      %p141 = scmp.eq.s32.totalorder %s32, 0
      %p142 = por %p140, %p141
      %p143 = scmp.ne.s32.totalorder %s131, %s132
      %p144 = scmp.eq.s32.totalorder %s33, 3
      %p145 = por %p143, %p144
      %p147 = scmp.ne.s32.totalorder %s132, %s146
      %p148 = scmp.eq.s32.totalorder %s33, 0
      %p149 = por %p147, %p148
      %s150 = ssub.s32 %s27, %s34
      %p151 = scmp.eq.s32.totalorder %s150, 0
      %s153 = sadd.s32 %s152, 1
      %s154 = scalar_select %p151, %s152, %s153
      %p157 = pneg %p151
      %p158 = scmp.eq.s32.totalorder %s27, 3
      %p159 = por %p157, %p158
      %p160 = scmp.ne.s32.totalorder %s152, %s155
      %p161 = scmp.eq.s32.totalorder %s27, 0
      %p162 = por %p160, %p161
      %p163 = scmp.ne.s32.totalorder %s152, %s155
      %p164 = scmp.eq.s32.totalorder %s32, 3
      %p165 = por %p163, %p164
      %p166 = scmp.ne.s32.totalorder %s155, %s156
      %p167 = scmp.eq.s32.totalorder %s32, 0
      %p168 = por %p166, %p167
      %p169 = scmp.ne.s32.totalorder %s155, %s156
      %p170 = scmp.eq.s32.totalorder %s33, 3
      %p171 = por %p169, %p170
      %p173 = scmp.ne.s32.totalorder %s156, %s172
      %p174 = scmp.eq.s32.totalorder %s33, 0
      %p175 = por %p173, %p174
      %s176 = ssub.s32 %s27, %s34
      %p177 = scmp.eq.s32.totalorder %s176, 0
      %s179 = sadd.s32 %s178, 1
      %s180 = scalar_select %p177, %s178, %s179
      %p183 = pneg %p177
      %p184 = scmp.eq.s32.totalorder %s27, 3
      %p185 = por %p183, %p184
      %p186 = scmp.ne.s32.totalorder %s178, %s181
      %p187 = scmp.eq.s32.totalorder %s27, 0
      %p188 = por %p186, %p187
      %p189 = scmp.ne.s32.totalorder %s178, %s181
      %p190 = scmp.eq.s32.totalorder %s32, 3
      %p191 = por %p189, %p190
      %p192 = scmp.ne.s32.totalorder %s181, %s182
      %p193 = scmp.eq.s32.totalorder %s32, 0
      %p194 = por %p192, %p193
      %p195 = scmp.ne.s32.totalorder %s181, %s182
      %p196 = scmp.eq.s32.totalorder %s33, 3
      %p197 = por %p195, %p196
      %p199 = scmp.ne.s32.totalorder %s182, %s198
      %p200 = scmp.eq.s32.totalorder %s33, 0
      %p201 = por %p199, %p200
      %s202 = ssub.s32 %s27, %s34
      %p203 = scmp.eq.s32.totalorder %s202, 0
      %s205 = sadd.s32 %s204, 1
      %s206 = scalar_select %p203, %s204, %s205
      %p209 = pneg %p203
      %p210 = scmp.eq.s32.totalorder %s27, 3
      %p211 = por %p209, %p210
      %p212 = scmp.ne.s32.totalorder %s204, %s207
      %p213 = scmp.eq.s32.totalorder %s27, 0
      %p214 = por %p212, %p213
      %p215 = scmp.ne.s32.totalorder %s204, %s207
      %p216 = scmp.eq.s32.totalorder %s32, 3
      %p217 = por %p215, %p216
      %p218 = scmp.ne.s32.totalorder %s207, %s208
      %p219 = scmp.eq.s32.totalorder %s32, 0
      %p220 = por %p218, %p219
      %p221 = scmp.ne.s32.totalorder %s207, %s208
      %p222 = scmp.eq.s32.totalorder %s33, 3
      %p223 = por %p221, %p222
      %p225 = scmp.ne.s32.totalorder %s208, %s224
      %p226 = scmp.eq.s32.totalorder %s33, 0
      %p227 = por %p225, %p226
      %p228 = scmp.le.s32.totalorder 1, %s27
      %p229 = scmp.lt.s32.totalorder %s27, 5
      %p230 = pnand %p228, %p229
      %p231 = pneg %p230
      // Predicated region
      $region9: #{tpu_custom_call.1} parent=5 // pred_check
        _
      $region10: #{tpu_custom_call.1} parent=5 // pred_check_branch
        %233 = sbr.rel (%p230) target = $region12
      $region11: #{tpu_custom_call.1} parent=5 // pred_region
        %s234 = ssub.s32 %s27, 1
        // Predicated region
        $region13: #{tpu_custom_call.1} parent=11 // pred_check
          %p235 = pneg %p100
        $region14: #{tpu_custom_call.1} parent=11 // pred_check_branch
          %237 = sbr.rel (%p235) target = $region16
        $region15: #{tpu_custom_call.1} parent=11 // pred_region
          %239 = vsyncadd [#allocation6], 0
          %s240 = sshll.u32 %s2, 4
          %s241 = int_to_ptr.hbm [resolvable:$true] %s240
          %s242 = sshll.u32 [#allocation7], 4
          %s243 = int_to_ptr.vmem [resolvable:$true] %s242
          %248 = dma.hbm_to_vmem [thread:$0]  %s241, 2048, %s243, [#allocation6], 128, 128, 8
        $region16: #{tpu_custom_call.1} parent=11 // pred_fallthru
          _
        // Predicated region
        $region17: #{tpu_custom_call.1} parent=11 // pred_check
          %p249 = pneg %p121
        $region18: #{tpu_custom_call.1} parent=11 // pred_check_branch
          %251 = sbr.rel (%p249) target = $region20
        $region19: #{tpu_custom_call.1} parent=11 // pred_region
          %253 = vsyncadd [#allocation9], 0
          %s254 = sshll.u32 %s3, 4
          %s255 = int_to_ptr.hbm [resolvable:$true] %s254
          %s256 = sshll.u32 [#allocation8], 4
          %s257 = int_to_ptr.vmem [resolvable:$true] %s256
          %262 = dma.hbm_to_vmem [thread:$0]  %s255, 2048, %s257, [#allocation9], 128, 128, 8
        $region20: #{tpu_custom_call.1} parent=11 // pred_fallthru
          _
        // Predicated region
        $region21: #{tpu_custom_call.1} parent=11 // pred_check
          %p263 = pneg %p142
        $region22: #{tpu_custom_call.1} parent=11 // pred_check_branch
          %265 = sbr.rel (%p263) target = $region24
        $region23: #{tpu_custom_call.1} parent=11 // pred_region
          %267 = vsyncadd [#allocation9], 0
          %s269 = sshll.u32 %s4, 4
          %s270 = int_to_ptr.hbm [resolvable:$true] %s269
          %s271 = sshll.u32 [#allocation10], 4
          %s272 = int_to_ptr.vmem [resolvable:$true] %s271
          %274 = dma.hbm_to_vmem [thread:$0]  %s270, 128, %s272, [#allocation9]
        $region24: #{tpu_custom_call.1} parent=11 // pred_fallthru
          _
      $region12: #{tpu_custom_call.1} parent=5 // pred_fallthru
        _
      %p275 = scmp.lt.s32.totalorder %s27, 4
      // Predicated region
      $region25: #{tpu_custom_call.1} parent=5 // pred_check
        %p276 = pneg %p275
      $region26: #{tpu_custom_call.1} parent=5 // pred_check_branch
        %278 = sbr.rel (%p276) target = $region28
      $region27: #{tpu_custom_call.1} parent=5 // pred_region
        // Predicated region
        $region29: #{tpu_custom_call.1} parent=27 // pred_check
          %p279 = pneg %p47
        $region30: #{tpu_custom_call.1} parent=27 // pred_check_branch
          %281 = sbr.rel (%p279) target = $region32
        $region31: #{tpu_custom_call.1} parent=27 // pred_region
          %s282 = sand.u32 %s37, 1
          %s283 = scalar_lea.sflag [#allocation3], %s282
          %s284 = sand.u32 %s37, 1
          %s285 = smul.addr %s284, 16
          %s286 = scalar_lea.vmem [#allocation2], %s285
          %s287 = smul.u32 2, %s27
          %289 = vsyncadd %s283, 0
          %s290 = smul.addr %s287, 8
          %s291 = scalar_lea.hbm %s0, %s290
          %s292 = sshll.u32 %s291, 4
          %s293 = int_to_ptr.hbm [resolvable:$true] %s292
          %s294 = sshll.u32 %s286, 4
          %s295 = int_to_ptr.vmem [resolvable:$true] %s294
          %300 = dma.hbm_to_vmem [thread:$0]  %s293, 256, %s295, %s283, 128, 128, 8
        $region32: #{tpu_custom_call.1} parent=27 // pred_fallthru
          _
        // Predicated region
        $region33: #{tpu_custom_call.1} parent=27 // pred_check
          %p301 = pneg %p73
        $region34: #{tpu_custom_call.1} parent=27 // pred_check_branch
          %303 = sbr.rel (%p301) target = $region36
        $region35: #{tpu_custom_call.1} parent=27 // pred_region
          %s304 = sand.u32 %s27, 1
          %s305 = scalar_lea.sflag [#allocation6], %s304
          %s306 = sand.u32 %s63, 1
          %s307 = smul.addr %s306, 16
          %s308 = scalar_lea.vmem [#allocation5], %s307
          %s309 = smul.u32 2, %s27
          %311 = vsyncadd %s305, 0
          %s312 = smul.addr %s309, 8
          %s313 = scalar_lea.hbm %s1, %s312
          %s314 = sshll.u32 %s313, 4
          %s315 = int_to_ptr.hbm [resolvable:$true] %s314
          %s316 = sshll.u32 %s308, 4
          %s317 = int_to_ptr.vmem [resolvable:$true] %s316
          %322 = dma.hbm_to_vmem [thread:$0]  %s315, 256, %s317, %s305, 128, 128, 8
        $region36: #{tpu_custom_call.1} parent=27 // pred_fallthru
          _
      $region28: #{tpu_custom_call.1} parent=5 // pred_fallthru
        _
      %p323 = scmp.le.s32.totalorder 1, %s27
      %p324 = scmp.lt.s32.totalorder %s27, 5
      %p325 = pnand %p323, %p324
      %p326 = pneg %p325
      // Predicated region
      $region37: #{tpu_custom_call.1} parent=5 // pred_check
        _
      $region38: #{tpu_custom_call.1} parent=5 // pred_check_branch
        %328 = sbr.rel (%p325) target = $region40
      $region39: #{tpu_custom_call.1} parent=5 // pred_region
        %s329 = ssub.s32 %s27, 1
        %s330 = sand.u32 %s40, 1
        %s331 = scalar_lea.sflag [#allocation3], %s330
        %s332 = sand.u32 %s40, 1
        %s333 = smul.addr %s332, 16
        %s334 = scalar_lea.vmem [#allocation2], %s333
        // Predicated region
        $region41: #{tpu_custom_call.1} parent=39 // pred_check
          %p335 = pneg %p53
        $region42: #{tpu_custom_call.1} parent=39 // pred_check_branch
          %337 = sbr.rel (%p335) target = $region44
        $region43: #{tpu_custom_call.1} parent=39 // pred_region
          %339 = dma.done %s331, 256
        $region44: #{tpu_custom_call.1} parent=39 // pred_fallthru
          _
        %s340 = sand.u32 %s32, 1
        %s341 = scalar_lea.sflag [#allocation6], %s340
        %s342 = sand.u32 %s66, 1
        %s343 = smul.addr %s342, 16
        %s344 = scalar_lea.vmem [#allocation5], %s343
        // Predicated region
        $region45: #{tpu_custom_call.1} parent=39 // pred_check
          %p345 = pneg %p79
        $region46: #{tpu_custom_call.1} parent=39 // pred_check_branch
          %347 = sbr.rel (%p345) target = $region48
        $region47: #{tpu_custom_call.1} parent=39 // pred_region
          %349 = dma.done %s341, 256
        $region48: #{tpu_custom_call.1} parent=39 // pred_fallthru
          _
        // Predicated region
        $region49: #{tpu_custom_call.1} parent=39 // pred_check
          %p350 = pneg %p100
        $region50: #{tpu_custom_call.1} parent=39 // pred_check_branch
          %352 = sbr.rel (%p350) target = $region52
        $region51: #{tpu_custom_call.1} parent=39 // pred_region
          %354 = dma.done [#allocation6], 2048
        $region52: #{tpu_custom_call.1} parent=39 // pred_fallthru
          _
        // Predicated region
        $region53: #{tpu_custom_call.1} parent=39 // pred_check
          %p355 = pneg %p121
        $region54: #{tpu_custom_call.1} parent=39 // pred_check_branch
          %357 = sbr.rel (%p355) target = $region56
        $region55: #{tpu_custom_call.1} parent=39 // pred_region
          %359 = dma.done [#allocation9], 2048
        $region56: #{tpu_custom_call.1} parent=39 // pred_fallthru
          _
        // Predicated region
        $region57: #{tpu_custom_call.1} parent=39 // pred_check
          %p360 = pneg %p142
        $region58: #{tpu_custom_call.1} parent=39 // pred_check_branch
          %362 = sbr.rel (%p360) target = $region60
        $region59: #{tpu_custom_call.1} parent=39 // pred_region
          %364 = dma.done [#allocation9], 128
        $region60: #{tpu_custom_call.1} parent=39 // pred_fallthru
          _
        %s365 = sand.u32 %s40, 1
        %s366 = scalar_lea.sflag [#allocation3], %s365
        %s367 = sand.u32 %s40, 1
        %s368 = smul.addr %s367, 16
        %s369 = scalar_lea.vmem [#allocation2], %s368
        %p370 = pneg %p53
        %p371 = pneg %p50
        %s372 = sand.u32 %s32, 1
        %s373 = scalar_lea.sflag [#allocation6], %s372
        %s374 = sand.u32 %s66, 1
        %s375 = smul.addr %s374, 16
        %s376 = scalar_lea.vmem [#allocation5], %s375
        %p377 = pneg %p79
        %p378 = pneg %p76
        %p379 = pneg %p100
        %p380 = pneg %p97
        %p381 = pneg %p121
        %p382 = pneg %p118
        %p383 = pneg %p142
        %p384 = pneg %p139
        %p385 = pneg %p168
        %p386 = pneg %p165
        %s387 = sand.u32 %s155, 1
        %s388 = scalar_lea.sflag [#allocation4], %s387
        %s389 = sand.u32 %s155, 1
        %s390 = smul.addr %s389, 16
        %s391 = scalar_lea.vmem [#allocation11], %s390
        %p392 = pneg %p194
        %p393 = pneg %p191
        %s394 = sand.u32 %s32, 1
        %s395 = scalar_lea.sflag [#allocation13], %s394
        %s396 = sand.u32 %s181, 1
        %s397 = smul.addr %s396, 16
        %s398 = scalar_lea.vmem [#allocation12], %s397
        %p399 = pneg %p220
        %p400 = pneg %p217
        %s401 = sand.u32 %s32, 1
        %s402 = scalar_lea.sflag [#allocation13], %s401
        %s403 = sand.u32 %s207, 1
        %s404 = smul.addr %s403, 8
        %s405 = scalar_lea.vmem [#allocation14], %s404
        %s406 = smul.u32 2, %s32
        %s407 = smul.u32 2, %s32
        %s408 = smul.u32 2, %s32
        %s409 = smul.u32 2, %s32
        %v410 = vld [vmem:[%s334] sm:$0xff]
        %v411 = vld [vmem:[%s334 + $0x8] sm:$0xff]
        %v412 = vld [vmem:[#allocation7] sm:$0xff]
        %v413 = vld [vmem:[#allocation7 + $0x8] sm:$0xff]
        %v414 = vld [vmem:[#allocation7 + $0x10] sm:$0xff]
        %v415 = vld [vmem:[#allocation7 + $0x18] sm:$0xff]
        %v416 = vld [vmem:[#allocation7 + $0x20] sm:$0xff]
        %v417 = vld [vmem:[#allocation7 + $0x28] sm:$0xff]
        %v418 = vld [vmem:[#allocation7 + $0x30] sm:$0xff]
        %v419 = vld [vmem:[#allocation7 + $0x38] sm:$0xff]
        %v420 = vld [vmem:[#allocation7 + $0x40] sm:$0xff]
        %v421 = vld [vmem:[#allocation7 + $0x48] sm:$0xff]
        %v422 = vld [vmem:[#allocation7 + $0x50] sm:$0xff]
        %v423 = vld [vmem:[#allocation7 + $0x58] sm:$0xff]
        %v424 = vld [vmem:[#allocation7 + $0x60] sm:$0xff]
        %v425 = vld [vmem:[#allocation7 + $0x68] sm:$0xff]
        %v426 = vld [vmem:[#allocation7 + $0x70] sm:$0xff]
        %v427 = vld [vmem:[#allocation7 + $0x78] sm:$0xff]
        %v428 = vld [vmem:[#allocation8] sm:$0xff]
        %v429 = vld [vmem:[#allocation8 + $0x8] sm:$0xff]
        %v430 = vld [vmem:[#allocation8 + $0x10] sm:$0xff]
        %v431 = vld [vmem:[#allocation8 + $0x18] sm:$0xff]
        %v432 = vld [vmem:[#allocation8 + $0x20] sm:$0xff]
        %v433 = vld [vmem:[#allocation8 + $0x28] sm:$0xff]
        %v434 = vld [vmem:[#allocation8 + $0x30] sm:$0xff]
        %v435 = vld [vmem:[#allocation8 + $0x38] sm:$0xff]
        %v436 = vld [vmem:[#allocation8 + $0x40] sm:$0xff]
        %v437 = vld [vmem:[#allocation8 + $0x48] sm:$0xff]
        %v438 = vld [vmem:[#allocation8 + $0x50] sm:$0xff]
        %v439 = vld [vmem:[#allocation8 + $0x58] sm:$0xff]
        %v440 = vld [vmem:[#allocation8 + $0x60] sm:$0xff]
        %v441 = vld [vmem:[#allocation8 + $0x68] sm:$0xff]
        %v442 = vld [vmem:[#allocation8 + $0x70] sm:$0xff]
        %v443 = vld [vmem:[#allocation8 + $0x78] sm:$0xff]
        %v444 = vld [vmem:[#allocation10] sm:$0x1]
        %v445 = vld [vmem:[#allocation10 + $0x1] sm:$0x1]
        %446 = vmatpush.msra.mxu0 %v427
        %447 = vmatpush.msra.mxu0 %v426
        %448 = vmatpush.msra.mxu0 %v425
        %449 = vmatpush.msra.mxu0 %v424
        %450 = vmatpush.msra.mxu0 %v423
        %451 = vmatpush.msra.mxu0 %v422
        %452 = vmatpush.msra.mxu0 %v421
        %453 = vmatpush.msra.mxu0 %v420
        %454 = vmatpush.msra.mxu0 %v419
        %455 = vmatpush.msra.mxu0 %v418
        %456 = vmatpush.msra.mxu0 %v417
        %457 = vmatpush.msra.mxu0 %v416
        %458 = vmatpush.msra.mxu0 %v415
        %459 = vmatpush.msra.mxu0 %v414
        %460 = vmatpush.msra.mxu0 %v413
        %461 = vmatpush.msra.mxu0 %v412
        %462 = vmatmul.f32.gmra.mxu0 %v410
        %v463 = vpop.f32.mrf.mxu0
        %v464 = vadd.f32 0.0, %v463
        %465 = vmatmul.f32.gmra.mxu0 %v411
        %v466 = vpop.f32.mrf.mxu0
        %v467 = vadd.f32 0.0, %v466
        %468 = vdwg.mxu0
        %469 = vst [vmem:[%s398] sm:$0xff] %v464
        %470 = vst [vmem:[%s398 + $0x8] sm:$0xff] %v467
        %v471 = vperm.slane %v444, 0
        %472 = vmatpush.msra.mxu0 %v443
        %473 = vmatpush.msra.mxu0 %v442
        %474 = vmatpush.msra.mxu0 %v441
        %475 = vmatpush.msra.mxu0 %v440
        %476 = vmatpush.msra.mxu0 %v439
        %477 = vmatpush.msra.mxu0 %v438
        %478 = vmatpush.msra.mxu0 %v437
        %479 = vmatpush.msra.mxu0 %v436
        %480 = vmatpush.msra.mxu0 %v435
        %481 = vmatpush.msra.mxu0 %v434
        %482 = vmatpush.msra.mxu0 %v433
        %483 = vmatpush.msra.mxu0 %v432
        %484 = vmatpush.msra.mxu0 %v431
        %485 = vmatpush.msra.mxu0 %v430
        %486 = vmatpush.msra.mxu0 %v429
        %487 = vmatpush.msra.mxu0 %v428
        %488 = vmatmul.f32.gmra.mxu0 %v464
        %v489 = vpop.f32.mrf.mxu0
        %v490 = vadd.f32 %v471, %v489
        %491 = vmatmul.f32.gmra.mxu0 %v467
        %v492 = vpop.f32.mrf.mxu0
        %v493 = vadd.f32 %v471, %v492
        %494 = vdwg.mxu0
        %v495 = vmax.f32 %v490, 0.0
        %v496 = vmax.f32 %v493, 0.0
        %497 = vst [vmem:[%s391] sm:$0xff] %v495
        %498 = vst [vmem:[%s391 + $0x8] sm:$0xff] %v496
        %v499 = vld [vmem:[%s344] sm:$0xff]
        %v500 = vld [vmem:[%s344 + $0x8] sm:$0xff]
        %v501 = vsub.f32 %v499, %v495
        %v502 = vsub.f32 %v500, %v496
        %v503 = vperm.slane %v445, 0
        %v504 = vmul.f32 %v503, %v501
        %v505 = vmul.f32 %v503, %v502
        %v506 = vmul.f32 %v504, %v501
        %v507 = vmul.f32 %v505, %v502
        %s508 = smul.u32 %s32, 16
        %v509 = vlaneseq
        %v510 = vshrl.u32 %v509, 7
        %v511 = vadd.s32 %v510, 8
        %v512 = vstv %s508
        %v513 = vadd.s32 %v512, %v510
        %v514 = vadd.s32 %v512, %v511
        %vm515 = vcmp.lt.s32.totalorder %v513, 60
        %vm516 = vcmp.lt.s32.totalorder %v514, 60
        %v517 = vsel %vm515, %v506, 0.0
        %v518 = vsel %vm516, %v507, 0.0
        %v519 = vadd.f32 %v517, %v518
        %520 = vst [vmem:[%s405] sm:$0xff] %v519
        %s521 = sand.u32 %s155, 1
        %s522 = scalar_lea.sflag [#allocation4], %s521
        %s523 = sand.u32 %s155, 1
        %s524 = smul.addr %s523, 16
        %s525 = scalar_lea.vmem [#allocation11], %s524
        %s526 = sand.u32 %s32, 1
        %s527 = scalar_lea.sflag [#allocation13], %s526
        %s528 = sand.u32 %s181, 1
        %s529 = smul.addr %s528, 16
        %s530 = scalar_lea.vmem [#allocation12], %s529
        %s531 = sand.u32 %s32, 1
        %s532 = scalar_lea.sflag [#allocation13], %s531
        %s533 = sand.u32 %s207, 1
        %s534 = smul.addr %s533, 8
        %s535 = scalar_lea.vmem [#allocation14], %s534
        // Predicated region
        $region61: #{tpu_custom_call.1} parent=39 // pred_check
          %p536 = pneg %p165
        $region62: #{tpu_custom_call.1} parent=39 // pred_check_branch
          %538 = sbr.rel (%p536) target = $region64
        $region63: #{tpu_custom_call.1} parent=39 // pred_region
          %s539 = smul.u32 2, %s32
          %541 = vsyncadd %s522, 0
          %s542 = smul.addr %s539, 8
          %s543 = scalar_lea.hbm %s5, %s542
          %s544 = sshll.u32 %s525, 4
          %s545 = int_to_ptr.vmem [resolvable:$true] %s544
          %s546 = sshll.u32 %s543, 4
          %s547 = int_to_ptr.hbm [resolvable:$true] %s546
          %552 = dma.vmem_to_hbm [thread:$0]  %s545, 256, %s547, %s522, 128, 128, 8
        $region64: #{tpu_custom_call.1} parent=39 // pred_fallthru
          _
        // Predicated region
        $region65: #{tpu_custom_call.1} parent=39 // pred_check
          %p553 = pneg %p191
        $region66: #{tpu_custom_call.1} parent=39 // pred_check_branch
          %555 = sbr.rel (%p553) target = $region68
        $region67: #{tpu_custom_call.1} parent=39 // pred_region
          %s556 = smul.u32 2, %s32
          %558 = vsyncadd %s527, 0
          %s559 = smul.addr %s556, 8
          %s560 = scalar_lea.hbm %s6, %s559
          %s561 = sshll.u32 %s530, 4
          %s562 = int_to_ptr.vmem [resolvable:$true] %s561
          %s563 = sshll.u32 %s560, 4
          %s564 = int_to_ptr.hbm [resolvable:$true] %s563
          %569 = dma.vmem_to_hbm [thread:$0]  %s562, 256, %s564, %s527, 128, 128, 8
        $region68: #{tpu_custom_call.1} parent=39 // pred_fallthru
          _
        // Predicated region
        $region69: #{tpu_custom_call.1} parent=39 // pred_check
          %p570 = pneg %p217
        $region70: #{tpu_custom_call.1} parent=39 // pred_check_branch
          %572 = sbr.rel (%p570) target = $region72
        $region71: #{tpu_custom_call.1} parent=39 // pred_region
          %574 = vsyncadd %s532, 0
          %s575 = smul.addr %s32, 8
          %s576 = scalar_lea.hbm %s7, %s575
          %s578 = sshll.u32 %s535, 4
          %s579 = int_to_ptr.vmem [resolvable:$true] %s578
          %s580 = sshll.u32 %s576, 4
          %s581 = int_to_ptr.hbm [resolvable:$true] %s580
          %583 = dma.vmem_to_hbm [thread:$0]  %s579, 128, %s581, %s532
        $region72: #{tpu_custom_call.1} parent=39 // pred_fallthru
          _
      $region40: #{tpu_custom_call.1} parent=5 // pred_fallthru
        _
      %p584 = scmp.le.s32.totalorder 2, %s27
      // Predicated region
      $region73: #{tpu_custom_call.1} parent=5 // pred_check
        %p585 = pneg %p584
      $region74: #{tpu_custom_call.1} parent=5 // pred_check_branch
        %587 = sbr.rel (%p585) target = $region76
      $region75: #{tpu_custom_call.1} parent=5 // pred_region
        %s588 = ssub.s32 %s27, 2
        // Predicated region
        $region77: #{tpu_custom_call.1} parent=75 // pred_check
          %p589 = pneg %p171
        $region78: #{tpu_custom_call.1} parent=75 // pred_check_branch
          %591 = sbr.rel (%p589) target = $region80
        $region79: #{tpu_custom_call.1} parent=75 // pred_region
          %s592 = sand.u32 %s156, 1
          %s593 = scalar_lea.sflag [#allocation4], %s592
          %s594 = sand.u32 %s156, 1
          %s595 = smul.addr %s594, 16
          %s596 = scalar_lea.vmem [#allocation11], %s595
          %598 = dma.done %s593, 256
        $region80: #{tpu_custom_call.1} parent=75 // pred_fallthru
          _
        // Predicated region
        $region81: #{tpu_custom_call.1} parent=75 // pred_check
          %p599 = pneg %p197
        $region82: #{tpu_custom_call.1} parent=75 // pred_check_branch
          %601 = sbr.rel (%p599) target = $region84
        $region83: #{tpu_custom_call.1} parent=75 // pred_region
          %s602 = sand.u32 %s33, 1
          %s603 = scalar_lea.sflag [#allocation13], %s602
          %s604 = sand.u32 %s182, 1
          %s605 = smul.addr %s604, 16
          %s606 = scalar_lea.vmem [#allocation12], %s605
          %608 = dma.done %s603, 256
        $region84: #{tpu_custom_call.1} parent=75 // pred_fallthru
          _
        // Predicated region
        $region85: #{tpu_custom_call.1} parent=75 // pred_check
          %p609 = pneg %p223
        $region86: #{tpu_custom_call.1} parent=75 // pred_check_branch
          %611 = sbr.rel (%p609) target = $region88
        $region87: #{tpu_custom_call.1} parent=75 // pred_region
          %s612 = sand.u32 %s33, 1
          %s613 = scalar_lea.sflag [#allocation13], %s612
          %s614 = sand.u32 %s208, 1
          %s615 = smul.addr %s614, 8
          %s616 = scalar_lea.vmem [#allocation14], %s615
          %618 = dma.done %s613, 128
        $region88: #{tpu_custom_call.1} parent=75 // pred_fallthru
          _
      $region76: #{tpu_custom_call.1} parent=5 // pred_fallthru
        _
    $region6: #{tpu_custom_call.1} parent=1 // loop_footer
      %s31 = sadd.s32 1, %s27
    $region7: #{tpu_custom_call.1} parent=1 // loop_footer_branch
      %26 = sbr.rel target = $region3
    $region8: #{tpu_custom_call.1} parent=1 // loop_exit
      _
    %619 = vsyncpa [#allocation3], 1
    %s620 = scalar_lea.sflag [#allocation3], 1
    %621 = vsyncpa %s620, 1
    %622 = vsyncpa [#allocation6], 1
    %s623 = scalar_lea.sflag [#allocation6], 1
    %624 = vsyncpa %s623, 1
    %625 = vsyncpa [#allocation9], 1
    %626 = vsyncpa [#allocation4], 1
    %s627 = scalar_lea.sflag [#allocation4], 1
    %628 = vsyncpa %s627, 1
    %629 = vsyncpa [#allocation13], 1
    %s630 = scalar_lea.sflag [#allocation13], 1
    %631 = vsyncpa %s630, 1

</llo_original>
